<compile_context>
chip_gen: v7x
topology: tpu7x:2x2x1
jax: 0.10.0
libtpu: 0.0.40
codegen_flags: <defaults>
</compile_context>

<pallas_src>
import functools

import jax
import jax.numpy as jnp
from jax.experimental import pallas as pl
from jax.experimental.pallas import tpu as pltpu

EPS = 1e-5


def _round_up(x: int, m: int) -> int:
    return ((x + m - 1) // m) * m


def resnorm_kernel(x_ref, w_ref, b_ref, g_ref, beta_ref, o_ref, acc_ref,
                   *, h_valid: int, tk: int):
    """grid = (row_tiles, k_tiles).

    Per (i, k): acc[i] += x[i, k-slab] @ W[k-slab, :]  plus the residual slab.
    At the last k: r = acc + b ; out = LayerNorm(r) * gamma + beta.
    """
    k = pl.program_id(1)

    @pl.when(k == 0)
    def _init():
        acc_ref[...] = jnp.zeros_like(acc_ref)

    xk = x_ref[...]                                              # (tm, tk), native dtype
    # MXU partial product in the native input dtype, f32 accumulation.
    acc_ref[...] += jnp.dot(xk, w_ref[...], preferred_element_type=jnp.float32)
    # Residual: this K-slab of x contributes to output columns [k*tk, k*tk + tk).
    col = pl.multiple_of(k * tk, 128)
    acc_ref[:, pl.ds(col, tk)] += xk.astype(jnp.float32)

    @pl.when(k == pl.num_programs(1) - 1)
    def _finalize():
        h_pad = o_ref.shape[-1]
        r = acc_ref[...] + b_ref[...].astype(jnp.float32)        # (tm, H_pad), f32
        inv_h = jnp.float32(1.0 / h_valid)
        # Padded lanes of r are exactly 0 (zero-padded x, W, b), so the raw row sum
        # already equals the sum over the valid lanes.
        mean = jnp.sum(r, axis=-1, keepdims=True) * inv_h
        centered = r - mean
        if h_pad != h_valid:
            lane = jax.lax.broadcasted_iota(jnp.int32, (1, h_pad), 1)
            centered = jnp.where(lane < h_valid, centered, 0.0)
        var = jnp.sum(centered * centered, axis=-1, keepdims=True) * inv_h
        inv_std = jax.lax.rsqrt(var + EPS)
        gamma = g_ref[...].astype(jnp.float32)
        beta = beta_ref[...].astype(jnp.float32)
        o_ref[...] = (centered * (inv_std * gamma) + beta).astype(o_ref.dtype)


@functools.partial(jax.jit, static_argnames=("row_tile", "k_tile", "matmul_dtype"))
def resnorm(x, w, b, gamma, beta, *, row_tile=512, k_tile=None, matmul_dtype=None):
    """x: (B, S, H) -> LayerNorm(x + x @ W + b) * gamma + beta, shape (B, S, H)."""
    B, S, H = x.shape
    M = B * S
    out_dtype = x.dtype

    if matmul_dtype is not None:
        x = x.astype(matmul_dtype)
        w = w.astype(matmul_dtype)

    x_itemsize = jnp.dtype(x.dtype).itemsize
    w_itemsize = jnp.dtype(w.dtype).itemsize
    out_itemsize = jnp.dtype(out_dtype).itemsize

    # Generation-aware VMEM ceiling (~75% of physical per-core VMEM).
    try:
        vmem_cap = int(getattr(pltpu.get_tpu_info(), "vmem_capacity_bytes", 64 << 20))
    except Exception:  # conservative fallback (also covers interpret mode)
        vmem_cap = 64 << 20
    vmem_budget = (vmem_cap * 3) // 4

    # ---- hidden-axis tiling: resident W vs. streamed K slabs ------------------
    H_pad = _round_up(H, 128)
    if k_tile is not None:
        tk = _round_up(min(k_tile, H_pad), 128)
        H_pad = _round_up(H, tk)
    elif 2 * H_pad * H_pad * w_itemsize <= vmem_budget // 3:
        tk = H_pad                      # resident W, single K step
    else:
        tk = 512                        # stream W in (512, H_pad) slabs
        H_pad = _round_up(H, tk)
    k_steps = H_pad // tk

    # ---- row tiling ------------------------------------------------------------
    row_min = {4: 8, 2: 16, 1: 32}.get(x_itemsize, 8)
    tm = _round_up(min(row_tile, _round_up(M, row_min)), row_min)

    def vmem_need(tm_):
        return (2 * tm_ * tk * x_itemsize            # x tiles (double-buffered)
                + 2 * tk * H_pad * w_itemsize        # W tiles (double-buffered)
                + 2 * tm_ * H_pad * out_itemsize     # out tiles (double-buffered)
                + 3 * tm_ * H_pad * 4                # f32 acc scratch + finalize temps
                + 8 * H_pad * 4                      # bias / gamma / beta
                + (1 << 20))                         # slack

    while vmem_need(tm) > vmem_budget and tm > row_min:
        tm = max(row_min, _round_up(tm // 2, row_min))

    M_pad = _round_up(M, tm)
    if M_pad // tm < 2 and M > row_min:
        # Guarantee >=2 row steps so "parallel" can shard across both TensorCores
        # on v7x (no effect on single-TC v5e/v6e beyond a trivially smaller tile).
        tm = _round_up(max(row_min, (M + 1) // 2), row_min)
        M_pad = _round_up(M, tm)

    # ---- padding (skipped entirely when shapes already line up) ----------------
    x2 = x.reshape(M, H)
    if M_pad != M or H_pad != H:
        x2 = jnp.pad(x2, ((0, M_pad - M), (0, H_pad - H)))
    w2 = w if H_pad == H else jnp.pad(w, ((0, H_pad - H), (0, H_pad - H)))
    b2 = b.reshape(1, H)
    g2 = gamma.reshape(1, H)
    beta2 = beta.reshape(1, H)
    if H_pad != H:
        pad = ((0, 0), (0, H_pad - H))
        b2, g2, beta2 = (jnp.pad(v, pad) for v in (b2, g2, beta2))

    need = vmem_need(tm)
    vmem_limit = int(min(max(need + (2 << 20), 8 << 20), vmem_cap))

    w_reads = 1 if k_steps == 1 else M_pad // tm
    cost = pl.CostEstimate(
        flops=2 * M_pad * H_pad * H_pad + 10 * M_pad * H_pad,
        transcendentals=M_pad,
        bytes_accessed=(M_pad * H_pad * (x_itemsize + out_itemsize)
                        + w_reads * H_pad * H_pad * w_itemsize),
    )

    kernel = functools.partial(resnorm_kernel, h_valid=H, tk=tk)

    out2 = pl.pallas_call(
        kernel,
        out_shape=jax.ShapeDtypeStruct((M_pad, H_pad), out_dtype),
        grid_spec=pltpu.PrefetchScalarGridSpec(
            num_scalar_prefetch=0,
            grid=(M_pad // tm, k_steps),
            in_specs=[
                pl.BlockSpec((tm, tk), lambda i, k: (i, k)),      # x K-slab
                pl.BlockSpec((tk, H_pad), lambda i, k: (k, 0)),   # W K-slab
                pl.BlockSpec((1, H_pad), lambda i, k: (0, 0)),    # bias
                pl.BlockSpec((1, H_pad), lambda i, k: (0, 0)),    # gamma
                pl.BlockSpec((1, H_pad), lambda i, k: (0, 0)),    # beta
            ],
            out_specs=pl.BlockSpec((tm, H_pad), lambda i, k: (i, 0)),
            scratch_shapes=[pltpu.VMEM((tm, H_pad), jnp.float32)],
        ),
        compiler_params=pltpu.CompilerParams(
            dimension_semantics=("parallel", "arbitrary"),
            vmem_limit_bytes=vmem_limit,
        ),
        cost_estimate=cost,
    )(x2, w2, b2, g2, beta2)

    out = out2 if (M_pad == M and H_pad == H) else out2[:M, :H]
    return out.reshape(B, S, H)


def resnorm_ref(x, w, b, gamma, beta):
    """Pure-JAX reference for correctness checking."""
    r = x + (jnp.einsum("bsh,hk->bsk", x, w) + b)
    mean = jnp.mean(r, axis=-1, keepdims=True)
    var = jnp.mean((r - mean) ** 2, axis=-1, keepdims=True)
    norm = (r - mean) * jax.lax.rsqrt(var + EPS)
    return norm * gamma + beta


if __name__ == "__main__":
    # Small shapes consistent with the module: batch=2, seq=8, hidden=32.
    B, S, H = 2, 8, 32
    key = jax.random.PRNGKey(0)
    kx, kw, kb = jax.random.split(key, 3)

    x = jax.random.normal(kx, (B, S, H), dtype=jnp.float32)

    # Deterministic parameter init (synthetic; mirrors nn.Linear + nn.LayerNorm shapes).
    w = jax.random.normal(kw, (H, H), dtype=jnp.float32) / jnp.sqrt(H)
    b = jax.random.normal(kb, (H,), dtype=jnp.float32) * 0.01
    gamma = jnp.ones((H,), dtype=jnp.float32)
    beta = jnp.zeros((H,), dtype=jnp.float32)

    out = jax.block_until_ready(resnorm(x, w, b, gamma, beta))
    ref = resnorm_ref(x, w, b, gamma, beta)

    assert out.shape == (B, S, H)
    assert jnp.allclose(out, ref, atol=1e-4, rtol=1e-4), "mismatch vs reference"

    print("KERNEL_OK")
</pallas_src>

<mosaic_0001>
module attributes {stable_mosaic.version = 11 : i64} {
  func.func @resnorm_kernel(%arg0: i32, %arg1: i32, %arg2: memref<8x128xf32, #tpu.memory_space<vmem>>, %arg3: memref<128x128xf32, #tpu.memory_space<vmem>>, %arg4: memref<1x128xf32, #tpu.memory_space<vmem>>, %arg5: memref<1x128xf32, #tpu.memory_space<vmem>>, %arg6: memref<1x128xf32, #tpu.memory_space<vmem>>, %arg7: memref<8x128xf32, #tpu.memory_space<vmem>>, %arg8: memref<8x128xf32, #tpu.memory_space<vmem>>) attributes {dimension_semantics = [#tpu.dimension_semantics<parallel>, #tpu.dimension_semantics<arbitrary>], iteration_bounds = array<i64: 2, 1>, scalar_prefetch = 0 : i64, scratch_operands = 1 : i64, tpu.core_type = #tpu.core_type<tc>, window_params = [{transform_indices = @transform_0, window_bounds = array<i64: 8, 128>}, {transform_indices = @transform_1, window_bounds = array<i64: 128, 128>}, {pipeline_mode = #tpu.pipeline_mode<synchronous>, transform_indices = @transform_2, window_bounds = array<i64: 1, 128>}, {pipeline_mode = #tpu.pipeline_mode<synchronous>, transform_indices = @transform_3, window_bounds = array<i64: 1, 128>}, {pipeline_mode = #tpu.pipeline_mode<synchronous>, transform_indices = @transform_4, window_bounds = array<i64: 1, 128>}, {transform_indices = @transform_5, window_bounds = array<i64: 8, 128>}]} {
    %c0_i32 = arith.constant 0 : i32
    %0 = arith.cmpi eq, %arg1, %c0_i32 : i32
    %1 = arith.extui %0 : i1 to i32
    %c0_i32_0 = arith.constant 0 : i32
    %2 = arith.cmpi ne, %1, %c0_i32_0 : i32
    scf.if %2 {
      %cst_12 = arith.constant 0.000000e+00 : f32
      %19 = vector.broadcast %cst_12 : f32 to vector<8x128xf32>
      %c0_13 = arith.constant 0 : index
      %c0_14 = arith.constant 0 : index
      %20 = vector.load %arg8[%c0_13, %c0_14] : memref<8x128xf32, #tpu.memory_space<vmem>>, vector<8x128xf32>
      tpu.vector_store %arg8[%c0_13, %c0_14], %19 {strides = array<i32>} : memref<8x128xf32, #tpu.memory_space<vmem>>, vector<8x128xf32>,
    } else {
    }
    %c0 = arith.constant 0 : index
    %c0_1 = arith.constant 0 : index
    %3 = vector.load %arg2[%c0, %c0_1] : memref<8x128xf32, #tpu.memory_space<vmem>>, vector<8x128xf32>
    %c0_2 = arith.constant 0 : index
    %c0_3 = arith.constant 0 : index
    %4 = vector.load %arg8[%c0_2, %c0_3] : memref<8x128xf32, #tpu.memory_space<vmem>>, vector<8x128xf32>
    %c0_4 = arith.constant 0 : index
    %c0_5 = arith.constant 0 : index
    %5 = vector.load %arg3[%c0_4, %c0_5] : memref<128x128xf32, #tpu.memory_space<vmem>>, vector<128x128xf32>
    %cst = arith.constant dense<0.000000e+00> : vector<8x128xf32>
    %6 = tpu.matmul %3, %5, %cst {dimension_numbers = #tpu.dot_dimension_numbers<[1], [0], [0], [1], [0, 0, 1, 1], [], []>} : vector<8x128xf32>, vector<128x128xf32>, vector<8x128xf32> -> vector<8x128xf32>
    %7 = arith.addf %4, %6 : vector<8x128xf32>
    %c0_6 = arith.constant 0 : index
    %c0_7 = arith.constant 0 : index
    %8 = vector.load %arg8[%c0_6, %c0_7] : memref<8x128xf32, #tpu.memory_space<vmem>>, vector<8x128xf32>
    tpu.vector_store %arg8[%c0_6, %c0_7], %7 {strides = array<i32>} : memref<8x128xf32, #tpu.memory_space<vmem>>, vector<8x128xf32>,
    %c128_i32 = arith.constant 128 : i32
    %9 = arith.muli %arg1, %c128_i32 : i32
    %10 = tpu.assume_multiple %9, 128 : i32
    %c0_8 = arith.constant 0 : index
    %11 = arith.index_cast %10 : i32 to index
    %12 = vector.load %arg8[%c0_8, %11] : memref<8x128xf32, #tpu.memory_space<vmem>>, vector<8x128xf32>
    %13 = arith.addf %12, %3 : vector<8x128xf32>
    %c0_9 = arith.constant 0 : index
    %14 = arith.index_cast %10 : i32 to index
    %15 = vector.load %arg8[%c0_9, %14] : memref<8x128xf32, #tpu.memory_space<vmem>>, vector<8x128xf32>
    tpu.vector_store %arg8[%c0_9, %14], %13 {strides = array<i32>} : memref<8x128xf32, #tpu.memory_space<vmem>>, vector<8x128xf32>,
    %c0_i32_10 = arith.constant 0 : i32
    %16 = arith.cmpi eq, %arg1, %c0_i32_10 : i32
    %17 = arith.extui %16 : i1 to i32
    %c0_i32_11 = arith.constant 0 : i32
    %18 = arith.cmpi ne, %17, %c0_i32_11 : i32
    scf.if %18 {
      %c0_12 = arith.constant 0 : index
      %c0_13 = arith.constant 0 : index
      %19 = vector.load %arg8[%c0_12, %c0_13] : memref<8x128xf32, #tpu.memory_space<vmem>>, vector<8x128xf32>
      %c0_14 = arith.constant 0 : index
      %c0_15 = arith.constant 0 : index
      %20 = vector.load %arg4[%c0_14, %c0_15] : memref<1x128xf32, #tpu.memory_space<vmem>>, vector<1x128xf32>
      %21 = vector.broadcast %20 : vector<1x128xf32> to vector<8x128xf32>
      %22 = arith.addf %19, %21 : vector<8x128xf32>
      %cst_16 = arith.constant dense<0.000000e+00> : vector<8xf32>
      %23 = vector.multi_reduction <add>, %22, %cst_16 [1] : vector<8x128xf32> to vector<8xf32>
      %24 = vector.shape_cast %23 : vector<8xf32> to vector<8x1xf32>
      %cst_17 = arith.constant 3.125000e-02 : f32
      %25 = vector.broadcast %cst_17 : f32 to vector<8x1xf32>
      %26 = arith.mulf %24, %25 : vector<8x1xf32>
      %27 = vector.broadcast %26 : vector<8x1xf32> to vector<8x128xf32>
      %28 = arith.subf %22, %27 : vector<8x128xf32>
      %29 = tpu.iota {dimensions = array<i32: 1>} : vector<1x128xi32>
      %c32_i32 = arith.constant 32 : i32
      %30 = vector.broadcast %c32_i32 : i32 to vector<1x128xi32>
      %31 = arith.cmpi slt, %29, %30 : vector<1x128xi32>
      %cst_18 = arith.constant 0.000000e+00 : f32
      %32 = vector.shape_cast %31 : vector<1x128xi1> to vector<1x128xi1>
      %33 = vector.broadcast %32 : vector<1x128xi1> to vector<8x128xi1>
      %34 = vector.broadcast %cst_18 : f32 to vector<8x128xf32>
      %35 = arith.select %33, %28, %34 : vector<8x128xi1>, vector<8x128xf32>
      %36 = arith.mulf %35, %35 : vector<8x128xf32>
      %cst_19 = arith.constant dense<0.000000e+00> : vector<8xf32>
      %37 = vector.multi_reduction <add>, %36, %cst_19 [1] : vector<8x128xf32> to vector<8xf32>
      %38 = vector.shape_cast %37 : vector<8xf32> to vector<8x1xf32>
      %cst_20 = arith.constant 3.125000e-02 : f32
      %39 = vector.broadcast %cst_20 : f32 to vector<8x1xf32>
      %40 = arith.mulf %38, %39 : vector<8x1xf32>
      %cst_21 = arith.constant 9.99999974E-6 : f32
      %41 = vector.broadcast %cst_21 : f32 to vector<8x1xf32>
      %42 = arith.addf %40, %41 : vector<8x1xf32>
      %43 = math.rsqrt %42 : vector<8x1xf32>
      %c0_22 = arith.constant 0 : index
      %c0_23 = arith.constant 0 : index
      %44 = vector.load %arg5[%c0_22, %c0_23] : memref<1x128xf32, #tpu.memory_space<vmem>>, vector<1x128xf32>
      %c0_24 = arith.constant 0 : index
      %c0_25 = arith.constant 0 : index
      %45 = vector.load %arg6[%c0_24, %c0_25] : memref<1x128xf32, #tpu.memory_space<vmem>>, vector<1x128xf32>
      %46 = vector.broadcast %43 : vector<8x1xf32> to vector<8x128xf32>
      %47 = vector.broadcast %44 : vector<1x128xf32> to vector<8x128xf32>
      %48 = arith.mulf %46, %47 : vector<8x128xf32>
      %49 = arith.mulf %35, %48 : vector<8x128xf32>
      %50 = vector.broadcast %45 : vector<1x128xf32> to vector<8x128xf32>
      %51 = arith.addf %49, %50 : vector<8x128xf32>
      %c0_26 = arith.constant 0 : index
      %c0_27 = arith.constant 0 : index
      %52 = vector.load %arg7[%c0_26, %c0_27] : memref<8x128xf32, #tpu.memory_space<vmem>>, vector<8x128xf32>
      tpu.vector_store %arg7[%c0_26, %c0_27], %51 {strides = array<i32>} : memref<8x128xf32, #tpu.memory_space<vmem>>, vector<8x128xf32>,
    } else {
    }
    return
  }
  func.func @transform_0(%arg0: i32, %arg1: i32) -> (i32, i32) {
    %c0_i32 = arith.constant 0 : i32
    return %arg0, %arg1 : i32, i32
  }
  func.func @transform_1(%arg0: i32, %arg1: i32) -> (i32, i32) {
    %c0_i32 = arith.constant 0 : i32
    %c0_i32_0 = arith.constant 0 : i32
    return %arg1, %c0_i32 : i32, i32
  }
  func.func @transform_2(%arg0: i32, %arg1: i32) -> (i32, i32) {
    %c0_i32 = arith.constant 0 : i32
    %c0_i32_0 = arith.constant 0 : i32
    %c0_i32_1 = arith.constant 0 : i32
    return %c0_i32, %c0_i32_0 : i32, i32
  }
  func.func @transform_3(%arg0: i32, %arg1: i32) -> (i32, i32) {
    %c0_i32 = arith.constant 0 : i32
    %c0_i32_0 = arith.constant 0 : i32
    %c0_i32_1 = arith.constant 0 : i32
    return %c0_i32, %c0_i32_0 : i32, i32
  }
  func.func @transform_4(%arg0: i32, %arg1: i32) -> (i32, i32) {
    %c0_i32 = arith.constant 0 : i32
    %c0_i32_0 = arith.constant 0 : i32
    %c0_i32_1 = arith.constant 0 : i32
    return %c0_i32, %c0_i32_0 : i32, i32
  }
  func.func @transform_5(%arg0: i32, %arg1: i32) -> (i32, i32) {
    %c0_i32 = arith.constant 0 : i32
    %c0_i32_0 = arith.constant 0 : i32
    return %arg0, %c0_i32 : i32, i32
  }
}

</mosaic_0001>

<llo_original>
// kernel: resnorm.1
$region0: #{resnorm.1}
  #allocation0 [shape = 'u32[]', space=smem, size = 0x4, offset = 0x4, fixed_abs, tag = 'smem constant byte address 0x4 - core index']
  #allocation1 [shape = 'u32[144,128]{1,0:T(1,128)}', space=vmem, size = 0x12000, scoped, tag = 'internal scratch']
  #allocation2 [shape = 'f32[8,128]{1,0:T(8,128)}', space=vmem, size = 0x1000, scoped, tag = 'scratch operand']
  %s0 = inlined_call_operand.vmem [shape: f32[16,128], index: 0, kind: input, shape index: {}]
  %s1 = inlined_call_operand.vmem [shape: f32[128,128], index: 1, kind: input, shape index: {}]
  %s2 = inlined_call_operand.vmem [shape: f32[1,128], index: 2, kind: input, shape index: {}]
  %s3 = inlined_call_operand.vmem [shape: f32[1,128], index: 3, kind: input, shape index: {}]
  %s4 = inlined_call_operand.vmem [shape: f32[1,128], index: 4, kind: input, shape index: {}]
  %s5 = inlined_call_operand.vmem [shape: f32[16,128], index: 5, kind: output, shape index: {}]
  %s6 = sld [smem:[#allocation0]]
  $region61: #{resnorm.1} parent=0
    _
  %s8 = ssub.s32 1, %s6
  %s9 = scalar_select 0, %s8, %s6
  loop: start=0, step=1, limit=4
  $region2: #{resnorm.1} parent=0 // loop_pre_header
    _
  $region3: #{resnorm.1} parent=0 // loop_header
    %s11 = sphi 0, %s15
    %p12 = scmp.ge.s32.totalorder %s11, 4
    %s18 = sphi 0, %s30
    %s19 = sphi 0, %s26
    %s20 = sphi 0, %s18
    %s21 = sphi 0, %s19
    %s22 = sphi 0, %s20
    %s23 = sphi 0, %s21
    %s35 = sphi 0, %s37
    %s38 = sphi 0, %s35
    %s39 = sphi 0, %s38
    %s55 = sphi 0, %s39
    %s61 = sphi 0, %s63
    %s64 = sphi 0, %s61
    %s65 = sphi 0, %s64
    %s81 = sphi 0, %s65
    %s85 = sphi 0, %s85
    %s87 = sphi 0, %s85
    %s88 = sphi 0, %s87
    %s102 = sphi 0, %s88
    %s106 = sphi 0, %s106
    %s108 = sphi 0, %s106
    %s109 = sphi 0, %s108
    %s123 = sphi 0, %s109
    %s127 = sphi 0, %s127
    %s129 = sphi 0, %s127
    %s130 = sphi 0, %s129
    %s144 = sphi 0, %s130
    %s150 = sphi 0, %s152
    %s153 = sphi 0, %s150
    %s154 = sphi 0, %s153
    %s170 = sphi 0, %s154
  $region4: #{resnorm.1} parent=0 // loop_header_branch
    %14 = sbr.rel (%p12) target = $region8
  $region5: #{resnorm.1} parent=0 // loop_body
    %s16 = ssub.s32 %s11, 1
    %s17 = ssub.s32 %s11, 2
    %s24 = sadd.s32 1, %s19
    %p25 = scmp.ge.s32.totalorder %s24, 1
    %s26 = scalar_select %p25, 0, %s24
    %s27 = sadd.s32 1, %s18
    %s28 = scalar_select %p25, %s27, %s18
    %p29 = scmp.ge.s32.totalorder %s28, 2
    %s30 = scalar_select %p29, 0, %s28
    %s31 = ssub.s32 %s18, %s30
    %s32 = ssub.s32 %s19, %s26
    %s33 = sor.u32 %s31, %s32
    %p34 = scmp.eq.s32.totalorder %s33, 0
    %s36 = sadd.s32 %s35, 1
    %s37 = scalar_select %p34, %s35, %s36
    %p40 = pneg %p34
    %p41 = scmp.eq.s32.totalorder %s11, 1
    %p42 = por %p40, %p41
    %p43 = scmp.ne.s32.totalorder %s35, %s38
    %p44 = scmp.eq.s32.totalorder %s11, 0
    %p45 = por %p43, %p44
    %p46 = scmp.ne.s32.totalorder %s35, %s38
    %p47 = scmp.eq.s32.totalorder %s16, 1
    %p48 = por %p46, %p47
    %p49 = scmp.ne.s32.totalorder %s38, %s39
    %p50 = scmp.eq.s32.totalorder %s16, 0
    %p51 = por %p49, %p50
    %p52 = scmp.ne.s32.totalorder %s38, %s39
    %p53 = scmp.eq.s32.totalorder %s17, 1
    %p54 = por %p52, %p53
    %p56 = scmp.ne.s32.totalorder %s39, %s55
    %p57 = scmp.eq.s32.totalorder %s17, 0
    %p58 = por %p56, %p57
    %s59 = ssub.s32 %s19, %s26
    %p60 = scmp.eq.s32.totalorder %s59, 0
    %s62 = sadd.s32 %s61, 1
    %s63 = scalar_select %p60, %s61, %s62
    %p66 = pneg %p60
    %p67 = scmp.eq.s32.totalorder %s11, 1
    %p68 = por %p66, %p67
    %p69 = scmp.ne.s32.totalorder %s61, %s64
    %p70 = scmp.eq.s32.totalorder %s11, 0
    %p71 = por %p69, %p70
    %p72 = scmp.ne.s32.totalorder %s61, %s64
    %p73 = scmp.eq.s32.totalorder %s16, 1
    %p74 = por %p72, %p73
    %p75 = scmp.ne.s32.totalorder %s64, %s65
    %p76 = scmp.eq.s32.totalorder %s16, 0
    %p77 = por %p75, %p76
    %p78 = scmp.ne.s32.totalorder %s64, %s65
    %p79 = scmp.eq.s32.totalorder %s17, 1
    %p80 = por %p78, %p79
    %p82 = scmp.ne.s32.totalorder %s65, %s81
    %p83 = scmp.eq.s32.totalorder %s17, 0
    %p84 = por %p82, %p83
    %s86 = sadd.s32 %s85, 1
    %p89 = scmp.eq.s32.totalorder %s11, 1
    %p90 = scmp.ne.s32.totalorder %s85, %s87
    %p91 = scmp.eq.s32.totalorder %s11, 0
    %p92 = por %p90, %p91
    %p93 = scmp.ne.s32.totalorder %s85, %s87
    %p94 = scmp.eq.s32.totalorder %s16, 1
    %p95 = por %p93, %p94
    %p96 = scmp.ne.s32.totalorder %s87, %s88
    %p97 = scmp.eq.s32.totalorder %s16, 0
    %p98 = por %p96, %p97
    %p99 = scmp.ne.s32.totalorder %s87, %s88
    %p100 = scmp.eq.s32.totalorder %s17, 1
    %p101 = por %p99, %p100
    %p103 = scmp.ne.s32.totalorder %s88, %s102
    %p104 = scmp.eq.s32.totalorder %s17, 0
    %p105 = por %p103, %p104
    %s107 = sadd.s32 %s106, 1
    %p110 = scmp.eq.s32.totalorder %s11, 1
    %p111 = scmp.ne.s32.totalorder %s106, %s108
    %p112 = scmp.eq.s32.totalorder %s11, 0
    %p113 = por %p111, %p112
    %p114 = scmp.ne.s32.totalorder %s106, %s108
    %p115 = scmp.eq.s32.totalorder %s16, 1
    %p116 = por %p114, %p115
    %p117 = scmp.ne.s32.totalorder %s108, %s109
    %p118 = scmp.eq.s32.totalorder %s16, 0
    %p119 = por %p117, %p118
    %p120 = scmp.ne.s32.totalorder %s108, %s109
    %p121 = scmp.eq.s32.totalorder %s17, 1
    %p122 = por %p120, %p121
    %p124 = scmp.ne.s32.totalorder %s109, %s123
    %p125 = scmp.eq.s32.totalorder %s17, 0
    %p126 = por %p124, %p125
    %s128 = sadd.s32 %s127, 1
    %p131 = scmp.eq.s32.totalorder %s11, 1
    %p132 = scmp.ne.s32.totalorder %s127, %s129
    %p133 = scmp.eq.s32.totalorder %s11, 0
    %p134 = por %p132, %p133
    %p135 = scmp.ne.s32.totalorder %s127, %s129
    %p136 = scmp.eq.s32.totalorder %s16, 1
    %p137 = por %p135, %p136
    %p138 = scmp.ne.s32.totalorder %s129, %s130
    %p139 = scmp.eq.s32.totalorder %s16, 0
    %p140 = por %p138, %p139
    %p141 = scmp.ne.s32.totalorder %s129, %s130
    %p142 = scmp.eq.s32.totalorder %s17, 1
    %p143 = por %p141, %p142
    %p145 = scmp.ne.s32.totalorder %s130, %s144
    %p146 = scmp.eq.s32.totalorder %s17, 0
    %p147 = por %p145, %p146
    %s148 = ssub.s32 %s18, %s30
    %p149 = scmp.eq.s32.totalorder %s148, 0
    %s151 = sadd.s32 %s150, 1
    %s152 = scalar_select %p149, %s150, %s151
    %p155 = pneg %p149
    %p156 = scmp.eq.s32.totalorder %s11, 1
    %p157 = por %p155, %p156
    %p158 = scmp.ne.s32.totalorder %s150, %s153
    %p159 = scmp.eq.s32.totalorder %s11, 0
    %p160 = por %p158, %p159
    %p161 = scmp.ne.s32.totalorder %s150, %s153
    %p162 = scmp.eq.s32.totalorder %s16, 1
    %p163 = por %p161, %p162
    %p164 = scmp.ne.s32.totalorder %s153, %s154
    %p165 = scmp.eq.s32.totalorder %s16, 0
    %p166 = por %p164, %p165
    %p167 = scmp.ne.s32.totalorder %s153, %s154
    %p168 = scmp.eq.s32.totalorder %s17, 1
    %p169 = por %p167, %p168
    %p171 = scmp.ne.s32.totalorder %s154, %s170
    %p172 = scmp.eq.s32.totalorder %s17, 0
    %p173 = por %p171, %p172
    %p174 = scmp.le.s32.totalorder 1, %s11
    %p175 = scmp.lt.s32.totalorder %s11, 3
    %p176 = pnand %p174, %p175
    %p177 = pneg %p176
    // Predicated region
    $region9: #{resnorm.1} parent=5 // pred_check
      _
    $region10: #{resnorm.1} parent=5 // pred_check_branch
      %179 = sbr.rel (%p176) target = $region12
    $region11: #{resnorm.1} parent=5 // pred_region
      %s180 = ssub.s32 %s11, 1
      // Predicated region
      $region13: #{resnorm.1} parent=11 // pred_check
        %p181 = pneg %p77
      $region14: #{resnorm.1} parent=11 // pred_check_branch
        %183 = sbr.rel (%p181) target = $region16
      $region15: #{resnorm.1} parent=11 // pred_region
        %s184 = smul.u32 16, %s21
        %p185 = scmp.lt.s32.totalorder %s184, 15
        %s186 = scalar_select %p185, %s184, 15
        %s187 = smul.addr %s186, 8
        %s188 = scalar_lea.vmem %s1, %s187
        %s189 = smul.u32 16, %s21
      $region16: #{resnorm.1} parent=11 // pred_fallthru
        _
      // Predicated region
      $region17: #{resnorm.1} parent=11 // pred_check
        %p190 = pneg %p98
      $region18: #{resnorm.1} parent=11 // pred_check_branch
        %192 = sbr.rel (%p190) target = $region20
      $region19: #{resnorm.1} parent=11 // pred_region
        _
      $region20: #{resnorm.1} parent=11 // pred_fallthru
        _
      // Predicated region
      $region21: #{resnorm.1} parent=11 // pred_check
        %p193 = pneg %p119
      $region22: #{resnorm.1} parent=11 // pred_check_branch
        %195 = sbr.rel (%p193) target = $region24
      $region23: #{resnorm.1} parent=11 // pred_region
        _
      $region24: #{resnorm.1} parent=11 // pred_fallthru
        _
      // Predicated region
      $region25: #{resnorm.1} parent=11 // pred_check
        %p196 = pneg %p140
      $region26: #{resnorm.1} parent=11 // pred_check_branch
        %198 = sbr.rel (%p196) target = $region28
      $region27: #{resnorm.1} parent=11 // pred_region
        _
      $region28: #{resnorm.1} parent=11 // pred_fallthru
        _
    $region12: #{resnorm.1} parent=5 // pred_fallthru
      _
    %p199 = scmp.lt.s32.totalorder %s11, 2
    // Predicated region
    $region29: #{resnorm.1} parent=5 // pred_check
      %p200 = pneg %p199
    $region30: #{resnorm.1} parent=5 // pred_check_branch
      %202 = sbr.rel (%p200) target = $region32
    $region31: #{resnorm.1} parent=5 // pred_region
      // Predicated region
      $region33: #{resnorm.1} parent=31 // pred_check
        %p203 = pneg %p45
      $region34: #{resnorm.1} parent=31 // pred_check_branch
        %205 = sbr.rel (%p203) target = $region36
      $region35: #{resnorm.1} parent=31 // pred_region
        %p206 = scmp.lt.s32.totalorder %s18, 1
        %s207 = scalar_select %p206, %s18, 1
        %p208 = scmp.lt.s32.totalorder %s19, 0
        %s209 = scalar_select %p208, %s19, 0
        %s210 = sadd.s32 %s209, %s207
        %s211 = smul.addr %s210, 8
        %s212 = scalar_lea.vmem %s0, %s211
      $region36: #{resnorm.1} parent=31 // pred_fallthru
        _
    $region32: #{resnorm.1} parent=5 // pred_fallthru
      _
    %p213 = scmp.le.s32.totalorder 1, %s11
    %p214 = scmp.lt.s32.totalorder %s11, 3
    %p215 = pnand %p213, %p214
    %p216 = pneg %p215
    // Predicated region
    $region37: #{resnorm.1} parent=5 // pred_check
      _
    $region38: #{resnorm.1} parent=5 // pred_check_branch
      %218 = sbr.rel (%p215) target = $region40
    $region39: #{resnorm.1} parent=5 // pred_region
      %s219 = ssub.s32 %s11, 1
      %p220 = scmp.lt.s32.totalorder %s20, 1
      %s221 = scalar_select %p220, %s20, 1
      %p222 = scmp.lt.s32.totalorder %s21, 0
      %s223 = scalar_select %p222, %s21, 0
      %s224 = sadd.s32 %s223, %s221
      %s225 = smul.addr %s224, 8
      %s226 = scalar_lea.vmem %s0, %s225
      %p227 = pneg %p51
      %p228 = pneg %p48
      %s229 = smul.u32 16, %s21
      %p230 = scmp.lt.s32.totalorder %s229, 15
      %s231 = scalar_select %p230, %s229, 15
      %s232 = smul.addr %s231, 8
      %s233 = scalar_lea.vmem %s1, %s232
      %p234 = pneg %p77
      %p235 = pneg %p74
      %p236 = pneg %p98
      %p237 = pneg %p95
      %p238 = pneg %p119
      %p239 = pneg %p116
      %p240 = pneg %p140
      %p241 = pneg %p137
      %p242 = pneg %p166
      %p243 = pneg %p163
      %p244 = scmp.lt.s32.totalorder %s20, 1
      %s245 = scalar_select %p244, %s20, 1
      %s246 = smul.addr %s245, 8
      %s247 = scalar_lea.vmem %s5, %s246
      %p248 = scmp.lt.s32.totalorder %s20, 1
      %s249 = scalar_select %p248, %s20, 1
      %p250 = scmp.lt.s32.totalorder %s21, 0
      %s251 = scalar_select %p250, %s21, 0
      %s252 = sadd.s32 %s251, %s249
      %s253 = smul.addr %s252, 8
      %s254 = scalar_lea.vmem %s0, %s253
      %s255 = smul.u32 16, %s21
      %p256 = scmp.lt.s32.totalorder %s255, 15
      %s257 = scalar_select %p256, %s255, 15
      %s258 = smul.addr %s257, 8
      %s259 = scalar_lea.vmem %s1, %s258
      %s260 = smul.u32 16, %s21
      %p261 = scmp.lt.s32.totalorder %s20, 1
      %s262 = scalar_select %p261, %s20, 1
      %s263 = smul.addr %s262, 8
      %s264 = scalar_lea.vmem %s5, %s263
      %p265 = scmp.eq.s32.totalorder %s21, 0
      // Predicated region
      $region41: #{resnorm.1} parent=39 // pred_check
        %p266 = pneg %p265
      $region42: #{resnorm.1} parent=39 // pred_check_branch
        %268 = sbr.rel (%p266) target = $region44
      $region43: #{resnorm.1} parent=39 // pred_region
        %269 = vst [vmem:[#allocation2] sm:$0xff] 0.0
      $region44: #{resnorm.1} parent=39 // pred_fallthru
        _
      %v270 = vld [vmem:[%s254] sm:$0xff]
      %v271 = vld [vmem:[#allocation2] sm:$0xff]
      %v272 = vld [vmem:[%s259] sm:$0xff]
      %v273 = vld [vmem:[%s259 + $0x8] sm:$0xff]
      %v274 = vld [vmem:[%s259 + $0x10] sm:$0xff]
      %v275 = vld [vmem:[%s259 + $0x18] sm:$0xff]
      %v276 = vld [vmem:[%s259 + $0x20] sm:$0xff]
      %v277 = vld [vmem:[%s259 + $0x28] sm:$0xff]
      %v278 = vld [vmem:[%s259 + $0x30] sm:$0xff]
      %v279 = vld [vmem:[%s259 + $0x38] sm:$0xff]
      %v280 = vld [vmem:[%s259 + $0x40] sm:$0xff]
      %v281 = vld [vmem:[%s259 + $0x48] sm:$0xff]
      %v282 = vld [vmem:[%s259 + $0x50] sm:$0xff]
      %v283 = vld [vmem:[%s259 + $0x58] sm:$0xff]
      %v284 = vld [vmem:[%s259 + $0x60] sm:$0xff]
      %v285 = vld [vmem:[%s259 + $0x68] sm:$0xff]
      %v286 = vld [vmem:[%s259 + $0x70] sm:$0xff]
      %v287 = vld [vmem:[%s259 + $0x78] sm:$0xff]
      %288 = vmatprep.subr.mxu0 0.0
      %289 = vmatpush1.msra.mxu0 %v272
      %290 = vmatprep.subr.mxu0 0.0
      %291 = vmatpush1.msra.mxu0 %v273
      %292 = vmatprep.subr.mxu0 0.0
      %293 = vmatpush1.msra.mxu0 %v274
      %294 = vmatprep.subr.mxu0 0.0
      %295 = vmatpush1.msra.mxu0 %v275
      %296 = vmatprep.subr.mxu0 0.0
      %297 = vmatpush1.msra.mxu0 %v276
      %298 = vmatprep.subr.mxu0 0.0
      %299 = vmatpush1.msra.mxu0 %v277
      %300 = vmatprep.subr.mxu0 0.0
      %301 = vmatpush1.msra.mxu0 %v278
      %302 = vmatprep.subr.mxu0 0.0
      %303 = vmatpush1.msra.mxu0 %v279
      %304 = vmatprep.subr.mxu0 0.0
      %305 = vmatpush1.msra.mxu0 %v280
      %306 = vmatprep.subr.mxu0 0.0
      %307 = vmatpush1.msra.mxu0 %v281
      %308 = vmatprep.subr.mxu0 0.0
      %309 = vmatpush1.msra.mxu0 %v282
      %310 = vmatprep.subr.mxu0 0.0
      %311 = vmatpush1.msra.mxu0 %v283
      %312 = vmatprep.subr.mxu0 0.0
      %313 = vmatpush1.msra.mxu0 %v284
      %314 = vmatprep.subr.mxu0 0.0
      %315 = vmatpush1.msra.mxu0 %v285
      %316 = vmatprep.subr.mxu0 0.0
      %317 = vmatpush1.msra.mxu0 %v286
      %318 = vmatprep.subr.mxu0 0.0
      %319 = vmatpush1.msra.mxu0 %v287
      %320 = vmatprep.subr.mxu0 0.0
      %321 = vmatpush1.msra.mxu0 0.0
      %322 = vmatprep.subr.mxu0 0.0
      %323 = vmatpush1.msra.mxu0 0.0
      %324 = vmatprep.subr.mxu0 0.0
      %325 = vmatpush1.msra.mxu0 0.0
      %326 = vmatprep.subr.mxu0 0.0
      %327 = vmatpush1.msra.mxu0 0.0
      %328 = vmatprep.subr.mxu0 0.0
      %329 = vmatpush1.msra.mxu0 0.0
      %330 = vmatprep.subr.mxu0 0.0
      %331 = vmatpush1.msra.mxu0 0.0
      %332 = vmatprep.subr.mxu0 0.0
      %333 = vmatpush1.msra.mxu0 0.0
      %334 = vmatprep.subr.mxu0 0.0
      %335 = vmatpush1.msra.mxu0 0.0
      %336 = vmatprep.subr.mxu0 0.0
      %337 = vmatpush1.msra.mxu0 0.0
      %338 = vmatprep.subr.mxu0 0.0
      %339 = vmatpush1.msra.mxu0 0.0
      %340 = vmatprep.subr.mxu0 0.0
      %341 = vmatpush1.msra.mxu0 0.0
      %342 = vmatprep.subr.mxu0 0.0
      %343 = vmatpush1.msra.mxu0 0.0
      %344 = vmatprep.subr.mxu0 0.0
      %345 = vmatpush1.msra.mxu0 0.0
      %346 = vmatprep.subr.mxu0 0.0
      %347 = vmatpush1.msra.mxu0 0.0
      %348 = vmatprep.subr.mxu0 0.0
      %349 = vmatpush1.msra.mxu0 0.0
      %350 = vmatprep.subr.mxu0 0.0
      %351 = vmatpush1.msra.mxu0 0.0
      %352 = vmatprep.mubr.f32.mxu0 0.0
      %353 = vmatmul.mubr.f32.gmra.mrb[0].mxu0 %v270
      %v354 = vpop.f32.mrb[0].mxu0
      %v355 = vadd.f32 0.0, %v354
      %v356 = vpop.f32.mrb[0].mxu0
      %357 = vdwg.mxu0
      %v358 = vadd.f32 %v271, %v355
      %359 = vst [vmem:[#allocation2] sm:$0xff] %v358
      %s360 = smul.u32 %s21, 128
      %s361 = sshra.s32 %s360, 7
      %s362 = sand.u32 %s360, 127
      %s363 = scalar_lea.vmem [#allocation2], %s361
      %v364 = vld [vmem:[%s363] sm:$0xff]
      %v365 = vadd.f32 %v364, %v270
      %366 = vst [vmem:[%s363] sm:$0xff] %v365
      // Predicated region
      $region45: #{resnorm.1} parent=39 // pred_check
        %p367 = pneg %p265
      $region46: #{resnorm.1} parent=39 // pred_check_branch
        %369 = sbr.rel (%p367) target = $region48
      $region47: #{resnorm.1} parent=39 // pred_region
        %v370 = vld [vmem:[#allocation2] sm:$0xff]
        %v371 = vld [vmem:[%s2] sm:$0x1]
        %v373 = vlaneseq
        %v374 = vshrl.u32 %v373, 7
        %v375 = vsub.s32 0, %v374
        %v376 = vrot.slane %v371, %v375
        %v378 = vadd.f32 %v370, %v376
        %379 = vadd.xlane.f32.xlu0 %v378
        %v380 = vpop.xlane.xlu0 %379
        %v381 = vmul.f32 %v380, 0.03125
        %v382 = vsub.f32 %v378, %v381
        %v383 = vlaneseq
        %v384 = vand.u32 %v383, 127
        %vm385 = vcmp.lt.s32.totalorder %v384, 32
        %v386 = vsel %vm385, 1, 0
        %vm387 = vcmp.eq.s32.totalorder %v386, 1
        %v388 = vsel %vm387, %v382, 0.0
        %v389 = vmul.f32 %v388, %v388
        %390 = vadd.xlane.f32.xlu0 %v389
        %v391 = vpop.xlane.xlu0 %390
        %v392 = vmul.f32 %v391, 0.03125
        %v393 = vadd.f32 %v392, 1e-05
        %v394 = vrsqrt.pop %v393
        %v395 = vld [vmem:[%s3] sm:$0x1]
        %v396 = vld [vmem:[%s4] sm:$0x1]
        %v398 = vlaneseq
        %v399 = vshrl.u32 %v398, 7
        %v400 = vsub.s32 0, %v399
        %v401 = vrot.slane %v395, %v400
        %v403 = vmul.f32 %v394, %v401
        %v404 = vmul.f32 %v388, %v403
        %v406 = vlaneseq
        %v407 = vshrl.u32 %v406, 7
        %v408 = vsub.s32 0, %v407
        %v409 = vrot.slane %v396, %v408
        %v411 = vadd.f32 %v404, %v409
        %412 = vst [vmem:[%s264] sm:$0xff] %v411
      $region48: #{resnorm.1} parent=39 // pred_fallthru
        _
      %p413 = scmp.lt.s32.totalorder %s20, 1
      %s414 = scalar_select %p413, %s20, 1
      %s415 = smul.addr %s414, 8
      %s416 = scalar_lea.vmem %s5, %s415
      // Predicated region
      $region49: #{resnorm.1} parent=39 // pred_check
        %p417 = pneg %p163
      $region50: #{resnorm.1} parent=39 // pred_check_branch
        %419 = sbr.rel (%p417) target = $region52
      $region51: #{resnorm.1} parent=39 // pred_region
        _
      $region52: #{resnorm.1} parent=39 // pred_fallthru
        _
    $region40: #{resnorm.1} parent=5 // pred_fallthru
      _
    %p420 = scmp.le.s32.totalorder 2, %s11
    // Predicated region
    $region53: #{resnorm.1} parent=5 // pred_check
      %p421 = pneg %p420
    $region54: #{resnorm.1} parent=5 // pred_check_branch
      %423 = sbr.rel (%p421) target = $region56
    $region55: #{resnorm.1} parent=5 // pred_region
      %s424 = ssub.s32 %s11, 2
      // Predicated region
      $region57: #{resnorm.1} parent=55 // pred_check
        %p425 = pneg %p169
      $region58: #{resnorm.1} parent=55 // pred_check_branch
        %427 = sbr.rel (%p425) target = $region60
      $region59: #{resnorm.1} parent=55 // pred_region
        %p428 = scmp.lt.s32.totalorder %s22, 1
        %s429 = scalar_select %p428, %s22, 1
        %s430 = smul.addr %s429, 8
        %s431 = scalar_lea.vmem %s5, %s430
      $region60: #{resnorm.1} parent=55 // pred_fallthru
        _
    $region56: #{resnorm.1} parent=5 // pred_fallthru
      _
  $region6: #{resnorm.1} parent=0 // loop_footer
    %s15 = sadd.s32 1, %s11
  $region7: #{resnorm.1} parent=0 // loop_footer_branch
    %10 = sbr.rel target = $region3
  $region8: #{resnorm.1} parent=0 // loop_exit
    _

</llo_original>
